<compile_context>
chip_gen: v5e
topology: v5e:2x2
jax: 0.10.0
libtpu: 0.0.40
codegen_flags: <defaults>
</compile_context>

<pallas_src>
import functools

import jax
import jax.numpy as jnp
from jax.experimental import pallas as pl
from jax.experimental.pallas import tpu as pltpu


def _softmax(x, axis):
    m = jnp.max(x, axis=axis, keepdims=True)
    p = jnp.exp(x - m)
    return p * pl.reciprocal(jnp.sum(p, axis=axis, keepdims=True), approx=True)


def attend_kernel(a_ref, b_ref, w1_ref, b1_ref, w2_ref, b2_ref,
                  beta_ref, alpha_ref, *, compute_dtype):
    G, La, D = a_ref.shape
    _, Lb, _ = b_ref.shape
    H = w1_ref.shape[1]

    A = a_ref[...]                                   # (G, La, D) f32
    B = b_ref[...]                                   # (G, Lb, D) f32

    # ---- Fused MLP: one (G*(La+Lb), D) slab through both Linear+ReLU layers ----
    X = jnp.concatenate([A.reshape(G * La, D), B.reshape(G * Lb, D)], axis=0)
    w1 = w1_ref[...].astype(compute_dtype)           # (D, H)
    w2 = w2_ref[...].astype(compute_dtype)           # (H, H)
    b1 = b1_ref[...]                                 # (1, H) f32
    b2 = b2_ref[...]                                 # (1, H) f32

    h = jnp.dot(X.astype(compute_dtype), w1,
                preferred_element_type=jnp.float32) + b1
    h = jnp.maximum(h, 0.0)
    h = jnp.dot(h.astype(compute_dtype), w2,
                preferred_element_type=jnp.float32) + b2
    fX = jnp.maximum(h, 0.0)                         # (G*(La+Lb), H) f32

    f_A = fX[:G * La].reshape(G, La, H).astype(compute_dtype)
    f_B = fX[G * La:].reshape(G, Lb, H).astype(compute_dtype)

    # ---- e[g] = f_A[g] @ f_B[g]^T, contracted on the hidden dim (no XLU transpose) ----
    e = jnp.einsum("gqh,gkh->gqk", f_A, f_B,
                   preferred_element_type=jnp.float32)          # (G, La, Lb)

    # beta = softmax(e, -1) @ B
    p_ab = _softmax(e, axis=-1).astype(compute_dtype)           # (G, La, Lb)
    beta = jnp.einsum("gqk,gkd->gqd", p_ab, B.astype(compute_dtype),
                      preferred_element_type=jnp.float32)       # (G, La, D)

    # alpha = softmax(e^T, -1) @ A  ==  (softmax of e over its La axis) contracted on La
    p_ba = _softmax(e, axis=1).astype(compute_dtype)            # (G, La, Lb)
    alpha = jnp.einsum("gqk,gqd->gkd", p_ba, A.astype(compute_dtype),
                       preferred_element_type=jnp.float32)      # (G, Lb, D)

    beta_ref[...] = beta.astype(beta_ref.dtype)
    alpha_ref[...] = alpha.astype(alpha_ref.dtype)


def _choose_group_size(batch, La, Lb, D, H, itemsize,
                       vmem_budget_bytes=8 << 20):
    """Pick how many batch elements to process per grid step.

    Budget is conservative so the same choice fits v7x's 64 MiB physical VMEM
    (32 MiB default scoped limit) as well as v5e/v6e.
    """
    per_batch = (
        2 * 2 * (La * D + Lb * D) * itemsize   # streamed in + out blocks, double buffered
        + 2 * (La + Lb) * H * 4                # fused-MLP activations (f32)
        + 3 * La * Lb * 4                      # e + two softmax probability tensors (f32)
    )
    g_max = max(1, vmem_budget_bytes // per_batch)
    if batch >= 2:
        # Keep >= 2 grid steps so the parallel batch axis can shard across v7x's 2 TCs.
        g_max = min(g_max, batch // 2)
    g = 1
    for cand in range(1, batch + 1):
        if cand <= g_max and batch % cand == 0:
            g = cand
    return g


def attend(A, B, w1, b1, w2, b2, *, compute_dtype=jnp.float32, group_size=None):
    batch, La, D = A.shape
    _, Lb, _ = B.shape
    H = w1.shape[1]
    b1_2d = b1.reshape(1, H)
    b2_2d = b2.reshape(1, H)

    G = group_size if group_size is not None else _choose_group_size(
        batch, La, Lb, D, H, jnp.dtype(A.dtype).itemsize)
    assert batch % G == 0, "batch must be divisible by the chosen group size"
    n_steps = batch // G

    # TODO(synk): for large La/Lb a flash-style tiled path (grid axis over Lb blocks,
    # online softmax, 'arbitrary' semantics) is needed instead of materializing e.

    grid_spec = pltpu.PrefetchScalarGridSpec(
        num_scalar_prefetch=0,
        grid=(n_steps,),
        in_specs=[
            pl.BlockSpec((G, La, D), lambda i: (i, 0, 0)),
            pl.BlockSpec((G, Lb, D), lambda i: (i, 0, 0)),
            # Weights/biases are grid-invariant (constant index_map); they are tiny so
            # the default double buffering costs negligible VMEM.
            pl.BlockSpec((D, H), lambda i: (0, 0)),
            pl.BlockSpec((1, H), lambda i: (0, 0)),
            pl.BlockSpec((H, H), lambda i: (0, 0)),
            pl.BlockSpec((1, H), lambda i: (0, 0)),
        ],
        out_specs=[
            pl.BlockSpec((G, La, D), lambda i: (i, 0, 0)),
            pl.BlockSpec((G, Lb, D), lambda i: (i, 0, 0)),
        ],
    )

    rows = batch * (La + Lb)
    flops = int(2 * rows * D * H + 2 * rows * H * H
                + 2 * batch * La * Lb * H          # e
                + 2 * batch * La * Lb * D          # beta
                + 2 * batch * La * Lb * D)         # alpha
    transcendentals = int(2 * batch * La * Lb + batch * (La + Lb))
    bytes_accessed = int(
        2 * (A.size + B.size) * jnp.dtype(A.dtype).itemsize      # read A,B; write beta,alpha
        + (w1.size + w2.size + b1.size + b2.size) * 4)

    beta, alpha = pl.pallas_call(
        functools.partial(attend_kernel, compute_dtype=compute_dtype),
        out_shape=(
            jax.ShapeDtypeStruct((batch, La, D), A.dtype),
            jax.ShapeDtypeStruct((batch, Lb, D), A.dtype),
        ),
        grid_spec=grid_spec,
        compiler_params=pltpu.CompilerParams(
            dimension_semantics=("parallel",)),
        cost_estimate=pl.CostEstimate(
            flops=flops, transcendentals=transcendentals,
            bytes_accessed=bytes_accessed),
    )(A, B, w1, b1_2d, w2, b2_2d)
    return beta, alpha


def attend_reference(A, B, w1, b1, w2, b2):
    def f(x):
        h = jnp.maximum(x @ w1 + b1, 0.0)
        return jnp.maximum(h @ w2 + b2, 0.0)
    f_A = f(A)
    f_B = f(B)
    e = jnp.einsum("bij,bkj->bik", f_A, f_B)
    beta = jnp.einsum("bik,bkd->bid", jax.nn.softmax(e, axis=-1), B)
    alpha = jnp.einsum("bik,bkd->bid",
                       jax.nn.softmax(jnp.swapaxes(e, 1, 2), axis=-1), A)
    return beta, alpha


if __name__ == "__main__":
    # Small shapes consistent with the module's forward:
    #   A: [batch, seq_A, num_inputs], B: [batch, seq_B, num_inputs]
    batch, seq_a, seq_b = 8, 8, 16
    num_inputs, num_hiddens = 32, 32

    key = jax.random.PRNGKey(0)
    k_a, k_b, k_w1, k_b1, k_w2, k_b2 = jax.random.split(key, 6)

    A = jax.random.normal(k_a, (batch, seq_a, num_inputs), dtype=jnp.float32)
    B = jax.random.normal(k_b, (batch, seq_b, num_inputs), dtype=jnp.float32)

    # Deterministic parameter init (Linear(num_inputs, H), Linear(H, H)), [in, out] layout.
    w1 = jax.random.normal(k_w1, (num_inputs, num_hiddens), dtype=jnp.float32) * 0.1
    b1 = jax.random.normal(k_b1, (num_hiddens,), dtype=jnp.float32) * 0.1
    w2 = jax.random.normal(k_w2, (num_hiddens, num_hiddens), dtype=jnp.float32) * 0.1
    b2 = jax.random.normal(k_b2, (num_hiddens,), dtype=jnp.float32) * 0.1

    # TODO(synk): Dropout(p=0.2) layers are identity in eval mode; training-mode
    # stochastic dropout is not implemented in the kernel.

    beta_ref, alpha_ref = attend_reference(A, B, w1, b1, w2, b2)

    # Full-precision matmul path.
    beta, alpha = attend(A, B, w1, b1, w2, b2, compute_dtype=jnp.float32)
    jax.block_until_ready((beta, alpha))
    assert jnp.allclose(beta, beta_ref, atol=5e-3, rtol=5e-3)
    assert jnp.allclose(alpha, alpha_ref, atol=5e-3, rtol=5e-3)

    # bf16-in / f32-accumulate path (recommended on v6e/v7x).
    beta_bf, alpha_bf = attend(A, B, w1, b1, w2, b2, compute_dtype=jnp.bfloat16)
    jax.block_until_ready((beta_bf, alpha_bf))
    assert jnp.allclose(beta_bf, beta_ref, atol=5e-2, rtol=5e-2)
    assert jnp.allclose(alpha_bf, alpha_ref, atol=5e-2, rtol=5e-2)

    print("KERNEL_OK")
</pallas_src>

<mosaic_0001>
module attributes {stable_mosaic.version = 11 : i64} {
  func.func @attend_kernel(%arg0: i32, %arg1: memref<4x8x32xf32, #tpu.memory_space<vmem>>, %arg2: memref<4x16x32xf32, #tpu.memory_space<vmem>>, %arg3: memref<32x32xf32, #tpu.memory_space<vmem>>, %arg4: memref<1x32xf32, #tpu.memory_space<vmem>>, %arg5: memref<32x32xf32, #tpu.memory_space<vmem>>, %arg6: memref<1x32xf32, #tpu.memory_space<vmem>>, %arg7: memref<4x8x32xf32, #tpu.memory_space<vmem>>, %arg8: memref<4x16x32xf32, #tpu.memory_space<vmem>>) attributes {dimension_semantics = [#tpu.dimension_semantics<parallel>], iteration_bounds = array<i64: 2>, scalar_prefetch = 0 : i64, scratch_operands = 0 : i64, tpu.core_type = #tpu.core_type<tc>, window_params = [{transform_indices = @transform_0, window_bounds = array<i64: 4, 8, 32>}, {transform_indices = @transform_1, window_bounds = array<i64: 4, 16, 32>}, {pipeline_mode = #tpu.pipeline_mode<synchronous>, transform_indices = @transform_2, window_bounds = array<i64: 32, 32>}, {pipeline_mode = #tpu.pipeline_mode<synchronous>, transform_indices = @transform_3, window_bounds = array<i64: 1, 32>}, {pipeline_mode = #tpu.pipeline_mode<synchronous>, transform_indices = @transform_4, window_bounds = array<i64: 32, 32>}, {pipeline_mode = #tpu.pipeline_mode<synchronous>, transform_indices = @transform_5, window_bounds = array<i64: 1, 32>}, {transform_indices = @transform_6, window_bounds = array<i64: 4, 8, 32>}, {transform_indices = @transform_7, window_bounds = array<i64: 4, 16, 32>}]} {
    %c0 = arith.constant 0 : index
    %c0_0 = arith.constant 0 : index
    %c0_1 = arith.constant 0 : index
    %0 = vector.load %arg1[%c0, %c0_0, %c0_1] : memref<4x8x32xf32, #tpu.memory_space<vmem>>, vector<4x8x32xf32>
    %c0_2 = arith.constant 0 : index
    %c0_3 = arith.constant 0 : index
    %c0_4 = arith.constant 0 : index
    %1 = vector.load %arg2[%c0_2, %c0_3, %c0_4] : memref<4x16x32xf32, #tpu.memory_space<vmem>>, vector<4x16x32xf32>
    %2 = vector.shape_cast %0 : vector<4x8x32xf32> to vector<32x32xf32>
    %3 = vector.shape_cast %1 : vector<4x16x32xf32> to vector<64x32xf32>
    %4 = tpu.concatenate %2, %3 in 0 : vector<32x32xf32>, vector<64x32xf32> -> vector<96x32xf32>
    %c0_5 = arith.constant 0 : index
    %c0_6 = arith.constant 0 : index
    %5 = vector.load %arg3[%c0_5, %c0_6] : memref<32x32xf32, #tpu.memory_space<vmem>>, vector<32x32xf32>
    %c0_7 = arith.constant 0 : index
    %c0_8 = arith.constant 0 : index
    %6 = vector.load %arg5[%c0_7, %c0_8] : memref<32x32xf32, #tpu.memory_space<vmem>>, vector<32x32xf32>
    %c0_9 = arith.constant 0 : index
    %c0_10 = arith.constant 0 : index
    %7 = vector.load %arg4[%c0_9, %c0_10] : memref<1x32xf32, #tpu.memory_space<vmem>>, vector<1x32xf32>
    %c0_11 = arith.constant 0 : index
    %c0_12 = arith.constant 0 : index
    %8 = vector.load %arg6[%c0_11, %c0_12] : memref<1x32xf32, #tpu.memory_space<vmem>>, vector<1x32xf32>
    %cst = arith.constant dense<0.000000e+00> : vector<96x32xf32>
    %9 = tpu.matmul %4, %5, %cst {dimension_numbers = #tpu.dot_dimension_numbers<[1], [0], [0], [1], [0, 0, 1, 1], [], []>} : vector<96x32xf32>, vector<32x32xf32>, vector<96x32xf32> -> vector<96x32xf32>
    %10 = vector.broadcast %7 : vector<1x32xf32> to vector<96x32xf32>
    %11 = arith.addf %9, %10 : vector<96x32xf32>
    %cst_13 = arith.constant 0.000000e+00 : f32
    %12 = vector.broadcast %cst_13 : f32 to vector<96x32xf32>
    %13 = arith.maximumf %11, %12 : vector<96x32xf32>
    %cst_14 = arith.constant dense<0.000000e+00> : vector<96x32xf32>
    %14 = tpu.matmul %13, %6, %cst_14 {dimension_numbers = #tpu.dot_dimension_numbers<[1], [0], [0], [1], [0, 0, 1, 1], [], []>} : vector<96x32xf32>, vector<32x32xf32>, vector<96x32xf32> -> vector<96x32xf32>
    %15 = vector.broadcast %8 : vector<1x32xf32> to vector<96x32xf32>
    %16 = arith.addf %14, %15 : vector<96x32xf32>
    %cst_15 = arith.constant 0.000000e+00 : f32
    %17 = vector.broadcast %cst_15 : f32 to vector<96x32xf32>
    %18 = arith.maximumf %16, %17 : vector<96x32xf32>
    %19 = vector.extract_strided_slice %18 {offsets = [0, 0], sizes = [32, 32], strides = [1, 1]} : vector<96x32xf32> to vector<32x32xf32>
    %20 = vector.shape_cast %19 : vector<32x32xf32> to vector<4x8x32xf32>
    %21 = vector.extract_strided_slice %18 {offsets = [32, 0], sizes = [64, 32], strides = [1, 1]} : vector<96x32xf32> to vector<64x32xf32>
    %22 = vector.shape_cast %21 : vector<64x32xf32> to vector<4x16x32xf32>
    "tpu.trace_start"() <{level = 10 : i32, message = "gqh,gkh->gqk"}> : () -> ()
    %cst_16 = arith.constant dense<0.000000e+00> : vector<4x8x16xf32>
    %23 = tpu.matmul %20, %22, %cst_16 {dimension_numbers = #tpu.dot_dimension_numbers<[2], [2], [1], [1], [0, 0, 0, 1, 1, 1], [0], [0]>} : vector<4x8x32xf32>, vector<4x16x32xf32>, vector<4x8x16xf32> -> vector<4x8x16xf32>
    "tpu.trace_stop"() : () -> ()
    %cst_17 = arith.constant dense<0xFF800000> : vector<4x8xf32>
    %24 = vector.multi_reduction <maximumf>, %23, %cst_17 [2] : vector<4x8x16xf32> to vector<4x8xf32>
    %25 = vector.shape_cast %24 : vector<4x8xf32> to vector<4x8x1xf32>
    %26 = vector.broadcast %25 : vector<4x8x1xf32> to vector<4x8x16xf32>
    %27 = arith.subf %23, %26 : vector<4x8x16xf32>
    %28 = math.exp %27 : vector<4x8x16xf32>
    %cst_18 = arith.constant dense<0.000000e+00> : vector<4x8xf32>
    %29 = vector.multi_reduction <add>, %28, %cst_18 [2] : vector<4x8x16xf32> to vector<4x8xf32>
    %30 = vector.shape_cast %29 : vector<4x8xf32> to vector<4x8x1xf32>
    %31 = tpu.reciprocal %30 {approx = true} : vector<4x8x1xf32> -> vector<4x8x1xf32>
    %32 = vector.broadcast %31 : vector<4x8x1xf32> to vector<4x8x16xf32>
    %33 = arith.mulf %28, %32 : vector<4x8x16xf32>
    "tpu.trace_start"() <{level = 10 : i32, message = "gqk,gkd->gqd"}> : () -> ()
    %cst_19 = arith.constant dense<0.000000e+00> : vector<4x8x32xf32>
    %34 = tpu.matmul %33, %1, %cst_19 {dimension_numbers = #tpu.dot_dimension_numbers<[2], [1], [1], [2], [0, 0, 0, 1, 1, 2], [0], [0]>} : vector<4x8x16xf32>, vector<4x16x32xf32>, vector<4x8x32xf32> -> vector<4x8x32xf32>
    "tpu.trace_stop"() : () -> ()
    %cst_20 = arith.constant dense<0xFF800000> : vector<4x16xf32>
    %35 = vector.multi_reduction <maximumf>, %23, %cst_20 [1] : vector<4x8x16xf32> to vector<4x16xf32>
    %36 = vector.shape_cast %35 : vector<4x16xf32> to vector<4x1x16xf32>
    %37 = vector.broadcast %36 : vector<4x1x16xf32> to vector<4x8x16xf32>
    %38 = arith.subf %23, %37 : vector<4x8x16xf32>
    %39 = math.exp %38 : vector<4x8x16xf32>
    %cst_21 = arith.constant dense<0.000000e+00> : vector<4x16xf32>
    %40 = vector.multi_reduction <add>, %39, %cst_21 [1] : vector<4x8x16xf32> to vector<4x16xf32>
    %41 = vector.shape_cast %40 : vector<4x16xf32> to vector<4x1x16xf32>
    %42 = tpu.reciprocal %41 {approx = true} : vector<4x1x16xf32> -> vector<4x1x16xf32>
    %43 = vector.broadcast %42 : vector<4x1x16xf32> to vector<4x8x16xf32>
    %44 = arith.mulf %39, %43 : vector<4x8x16xf32>
    "tpu.trace_start"() <{level = 10 : i32, message = "gqk,gqd->gkd"}> : () -> ()
    %cst_22 = arith.constant dense<0.000000e+00> : vector<4x16x32xf32>
    %45 = tpu.matmul %44, %0, %cst_22 {dimension_numbers = #tpu.dot_dimension_numbers<[1], [1], [2], [2], [0, 0, 0, 2, 1, 2], [0], [0]>} : vector<4x8x16xf32>, vector<4x8x32xf32>, vector<4x16x32xf32> -> vector<4x16x32xf32>
    "tpu.trace_stop"() : () -> ()
    %c0_23 = arith.constant 0 : index
    %c0_24 = arith.constant 0 : index
    %c0_25 = arith.constant 0 : index
    %46 = vector.load %arg7[%c0_23, %c0_24, %c0_25] : memref<4x8x32xf32, #tpu.memory_space<vmem>>, vector<4x8x32xf32>
    tpu.vector_store %arg7[%c0_23, %c0_24, %c0_25], %34 {strides = array<i32>} : memref<4x8x32xf32, #tpu.memory_space<vmem>>, vector<4x8x32xf32>,
    %c0_26 = arith.constant 0 : index
    %c0_27 = arith.constant 0 : index
    %c0_28 = arith.constant 0 : index
    %47 = vector.load %arg8[%c0_26, %c0_27, %c0_28] : memref<4x16x32xf32, #tpu.memory_space<vmem>>, vector<4x16x32xf32>
    tpu.vector_store %arg8[%c0_26, %c0_27, %c0_28], %45 {strides = array<i32>} : memref<4x16x32xf32, #tpu.memory_space<vmem>>, vector<4x16x32xf32>,
    return
  }
  func.func @transform_0(%arg0: i32) -> (i32, i32, i32) {
    %c0_i32 = arith.constant 0 : i32
    %c0_i32_0 = arith.constant 0 : i32
    %c0_i32_1 = arith.constant 0 : i32
    return %arg0, %c0_i32, %c0_i32_0 : i32, i32, i32
  }
  func.func @transform_1(%arg0: i32) -> (i32, i32, i32) {
    %c0_i32 = arith.constant 0 : i32
    %c0_i32_0 = arith.constant 0 : i32
    %c0_i32_1 = arith.constant 0 : i32
    return %arg0, %c0_i32, %c0_i32_0 : i32, i32, i32
  }
  func.func @transform_2(%arg0: i32) -> (i32, i32) {
    %c0_i32 = arith.constant 0 : i32
    %c0_i32_0 = arith.constant 0 : i32
    %c0_i32_1 = arith.constant 0 : i32
    return %c0_i32, %c0_i32_0 : i32, i32
  }
  func.func @transform_3(%arg0: i32) -> (i32, i32) {
    %c0_i32 = arith.constant 0 : i32
    %c0_i32_0 = arith.constant 0 : i32
    %c0_i32_1 = arith.constant 0 : i32
    return %c0_i32, %c0_i32_0 : i32, i32
  }
  func.func @transform_4(%arg0: i32) -> (i32, i32) {
    %c0_i32 = arith.constant 0 : i32
    %c0_i32_0 = arith.constant 0 : i32
    %c0_i32_1 = arith.constant 0 : i32
    return %c0_i32, %c0_i32_0 : i32, i32
  }
  func.func @transform_5(%arg0: i32) -> (i32, i32) {
    %c0_i32 = arith.constant 0 : i32
    %c0_i32_0 = arith.constant 0 : i32
    %c0_i32_1 = arith.constant 0 : i32
    return %c0_i32, %c0_i32_0 : i32, i32
  }
  func.func @transform_6(%arg0: i32) -> (i32, i32, i32) {
    %c0_i32 = arith.constant 0 : i32
    %c0_i32_0 = arith.constant 0 : i32
    %c0_i32_1 = arith.constant 0 : i32
    return %arg0, %c0_i32, %c0_i32_0 : i32, i32, i32
  }
  func.func @transform_7(%arg0: i32) -> (i32, i32, i32) {
    %c0_i32 = arith.constant 0 : i32
    %c0_i32_0 = arith.constant 0 : i32
    %c0_i32_1 = arith.constant 0 : i32
    return %arg0, %c0_i32, %c0_i32_0 : i32, i32, i32
  }
}

</mosaic_0001>

<llo_original>
// kernel: tpu_custom_call.1
$region0: #{tpu_custom_call.1}
  #allocation0 [shape = 'u32[]', space=smem, size = 0x4, offset = 0x4, fixed_abs, tag = 'smem constant byte address 0x4 - core index']
  #allocation1 [shape = 'u32[72,128]{1,0:T(1,128)}', space=vmem, size = 0x9000, scoped, tag = 'internal scratch']
  %s0 = inlined_call_operand.hbm [shape: f32[8,8,32], index: 0, kind: input, shape index: {}]
  %s1 = inlined_call_operand.hbm [shape: f32[8,16,32], index: 1, kind: input, shape index: {}]
  %s2 = inlined_call_operand.hbm [shape: f32[32,32], index: 2, kind: input, shape index: {}]
  %s3 = inlined_call_operand.vmem [shape: f32[1,32], index: 3, kind: input, shape index: {}]
  %s4 = inlined_call_operand.hbm [shape: f32[32,32], index: 4, kind: input, shape index: {}]
  %s5 = inlined_call_operand.vmem [shape: f32[1,32], index: 5, kind: input, shape index: {}]
  %s6 = inlined_call_operand.hbm [shape: f32[8,8,32], index: 6, kind: output, shape index: {0}]
  %s7 = inlined_call_operand.hbm [shape: f32[8,16,32], index: 7, kind: output, shape index: {1}]
  %8 = xla_tuple %s6, %s7
  %s9 = sld [smem:[#allocation0]]
  $region81: #{tpu_custom_call.1} parent=0
    _
  %s11 = ssub.s32 1, %s9
  %s12 = scalar_select 0, %s11, %s9
  $region1: #{tpu_custom_call.1} parent=0
    #allocation2 [shape = 'u8[32768]{0}', space=vmem, size = 0x8000, scoped, tag = 'input window, operand 0']
    #allocation3 [shape = 's32[2]{0}', space=sflag, size = 0x8, scoped, tag = 'scoped memory for tpu_custom_call.1']
    #allocation4 [shape = 's32[2]{0}', space=sflag, size = 0x8, scoped, tag = 'scoped memory for tpu_custom_call.1']
    #allocation5 [shape = 'u8[65536]{0}', space=vmem, size = 0x10000, scoped, tag = 'input window, operand 1']
    #allocation6 [shape = 's32[2]{0}', space=sflag, size = 0x8, scoped, tag = 'scoped memory for tpu_custom_call.1']
    #allocation7 [shape = 'u8[16384]{0}', space=vmem, size = 0x4000, scoped, tag = 'input window, operand 2, single buffered']
    #allocation8 [shape = 'u8[16384]{0}', space=vmem, size = 0x4000, scoped, tag = 'input window, operand 4, single buffered']
    #allocation9 [shape = 's32[1]{0}', space=sflag, size = 0x4, scoped, tag = 'scoped memory for tpu_custom_call.1']
    #allocation10 [shape = 'u8[32768]{0}', space=vmem, size = 0x8000, scoped, tag = 'output window, operand 0']
    #allocation11 [shape = 'u8[65536]{0}', space=vmem, size = 0x10000, scoped, tag = 'output window, operand 1']
    #allocation12 [shape = 's32[2]{0}', space=sflag, size = 0x8, scoped, tag = 'scoped memory for tpu_custom_call.1']
    %13 = vsyncpa [#allocation3], 0
    %s14 = scalar_lea.sflag [#allocation3], 1
    %15 = vsyncpa %s14, 0
    %16 = vsyncpa [#allocation6], 0
    %s17 = scalar_lea.sflag [#allocation6], 1
    %18 = vsyncpa %s17, 0
    %19 = vsyncpa [#allocation9], 0
    %20 = vsyncpa [#allocation4], 0
    %s21 = scalar_lea.sflag [#allocation4], 1
    %22 = vsyncpa %s21, 0
    %23 = vsyncpa [#allocation12], 0
    %s24 = scalar_lea.sflag [#allocation12], 1
    %25 = vsyncpa %s24, 0
    loop: start=0, step=1, limit=4
    $region2: #{tpu_custom_call.1} parent=1 // loop_pre_header
      _
    $region3: #{tpu_custom_call.1} parent=1 // loop_header
      %s27 = sphi 0, %s31
      %p28 = scmp.ge.s32.totalorder %s27, 4
      %s37 = sphi 0, %s39
      %s40 = sphi 0, %s37
      %s41 = sphi 0, %s40
      %s57 = sphi 0, %s41
      %s63 = sphi 0, %s65
      %s66 = sphi 0, %s63
      %s67 = sphi 0, %s66
      %s83 = sphi 0, %s67
      %s87 = sphi 0, %s87
      %s89 = sphi 0, %s87
      %s90 = sphi 0, %s89
      %s104 = sphi 0, %s90
      %s108 = sphi 0, %s108
      %s110 = sphi 0, %s108
      %s111 = sphi 0, %s110
      %s125 = sphi 0, %s111
      %s129 = sphi 0, %s129
      %s131 = sphi 0, %s129
      %s132 = sphi 0, %s131
      %s146 = sphi 0, %s132
      %s150 = sphi 0, %s150
      %s152 = sphi 0, %s150
      %s153 = sphi 0, %s152
      %s167 = sphi 0, %s153
      %s173 = sphi 0, %s175
      %s176 = sphi 0, %s173
      %s177 = sphi 0, %s176
      %s193 = sphi 0, %s177
      %s199 = sphi 0, %s201
      %s202 = sphi 0, %s199
      %s203 = sphi 0, %s202
      %s219 = sphi 0, %s203
    $region4: #{tpu_custom_call.1} parent=1 // loop_header_branch
      %30 = sbr.rel (%p28) target = $region8
    $region5: #{tpu_custom_call.1} parent=1 // loop_body
      %s32 = ssub.s32 %s27, 1
      %s33 = ssub.s32 %s27, 2
      %s34 = sadd.s32 %s27, 1
      %s35 = ssub.s32 %s27, %s34
      %p36 = scmp.eq.s32.totalorder %s35, 0
      %s38 = sadd.s32 %s37, 1
      %s39 = scalar_select %p36, %s37, %s38
      %p42 = pneg %p36
      %p43 = scmp.eq.s32.totalorder %s27, 1
      %p44 = por %p42, %p43
      %p45 = scmp.ne.s32.totalorder %s37, %s40
      %p46 = scmp.eq.s32.totalorder %s27, 0
      %p47 = por %p45, %p46
      %p48 = scmp.ne.s32.totalorder %s37, %s40
      %p49 = scmp.eq.s32.totalorder %s32, 1
      %p50 = por %p48, %p49
      %p51 = scmp.ne.s32.totalorder %s40, %s41
      %p52 = scmp.eq.s32.totalorder %s32, 0
      %p53 = por %p51, %p52
      %p54 = scmp.ne.s32.totalorder %s40, %s41
      %p55 = scmp.eq.s32.totalorder %s33, 1
      %p56 = por %p54, %p55
      %p58 = scmp.ne.s32.totalorder %s41, %s57
      %p59 = scmp.eq.s32.totalorder %s33, 0
      %p60 = por %p58, %p59
      %s61 = ssub.s32 %s27, %s34
      %p62 = scmp.eq.s32.totalorder %s61, 0
      %s64 = sadd.s32 %s63, 1
      %s65 = scalar_select %p62, %s63, %s64
      %p68 = pneg %p62
      %p69 = scmp.eq.s32.totalorder %s27, 1
      %p70 = por %p68, %p69
      %p71 = scmp.ne.s32.totalorder %s63, %s66
      %p72 = scmp.eq.s32.totalorder %s27, 0
      %p73 = por %p71, %p72
      %p74 = scmp.ne.s32.totalorder %s63, %s66
      %p75 = scmp.eq.s32.totalorder %s32, 1
      %p76 = por %p74, %p75
      %p77 = scmp.ne.s32.totalorder %s66, %s67
      %p78 = scmp.eq.s32.totalorder %s32, 0
      %p79 = por %p77, %p78
      %p80 = scmp.ne.s32.totalorder %s66, %s67
      %p81 = scmp.eq.s32.totalorder %s33, 1
      %p82 = por %p80, %p81
      %p84 = scmp.ne.s32.totalorder %s67, %s83
      %p85 = scmp.eq.s32.totalorder %s33, 0
      %p86 = por %p84, %p85
      %s88 = sadd.s32 %s87, 1
      %p91 = scmp.eq.s32.totalorder %s27, 1
      %p92 = scmp.ne.s32.totalorder %s87, %s89
      %p93 = scmp.eq.s32.totalorder %s27, 0
      %p94 = por %p92, %p93
      %p95 = scmp.ne.s32.totalorder %s87, %s89
      %p96 = scmp.eq.s32.totalorder %s32, 1
      %p97 = por %p95, %p96
      %p98 = scmp.ne.s32.totalorder %s89, %s90
      %p99 = scmp.eq.s32.totalorder %s32, 0
      %p100 = por %p98, %p99
      %p101 = scmp.ne.s32.totalorder %s89, %s90
      %p102 = scmp.eq.s32.totalorder %s33, 1
      %p103 = por %p101, %p102
      %p105 = scmp.ne.s32.totalorder %s90, %s104
      %p106 = scmp.eq.s32.totalorder %s33, 0
      %p107 = por %p105, %p106
      %s109 = sadd.s32 %s108, 1
      %p112 = scmp.eq.s32.totalorder %s27, 1
      %p113 = scmp.ne.s32.totalorder %s108, %s110
      %p114 = scmp.eq.s32.totalorder %s27, 0
      %p115 = por %p113, %p114
      %p116 = scmp.ne.s32.totalorder %s108, %s110
      %p117 = scmp.eq.s32.totalorder %s32, 1
      %p118 = por %p116, %p117
      %p119 = scmp.ne.s32.totalorder %s110, %s111
      %p120 = scmp.eq.s32.totalorder %s32, 0
      %p121 = por %p119, %p120
      %p122 = scmp.ne.s32.totalorder %s110, %s111
      %p123 = scmp.eq.s32.totalorder %s33, 1
      %p124 = por %p122, %p123
      %p126 = scmp.ne.s32.totalorder %s111, %s125
      %p127 = scmp.eq.s32.totalorder %s33, 0
      %p128 = por %p126, %p127
      %s130 = sadd.s32 %s129, 1
      %p133 = scmp.eq.s32.totalorder %s27, 1
      %p134 = scmp.ne.s32.totalorder %s129, %s131
      %p135 = scmp.eq.s32.totalorder %s27, 0
      %p136 = por %p134, %p135
      %p137 = scmp.ne.s32.totalorder %s129, %s131
      %p138 = scmp.eq.s32.totalorder %s32, 1
      %p139 = por %p137, %p138
      %p140 = scmp.ne.s32.totalorder %s131, %s132
      %p141 = scmp.eq.s32.totalorder %s32, 0
      %p142 = por %p140, %p141
      %p143 = scmp.ne.s32.totalorder %s131, %s132
      %p144 = scmp.eq.s32.totalorder %s33, 1
      %p145 = por %p143, %p144
      %p147 = scmp.ne.s32.totalorder %s132, %s146
      %p148 = scmp.eq.s32.totalorder %s33, 0
      %p149 = por %p147, %p148
      %s151 = sadd.s32 %s150, 1
      %p154 = scmp.eq.s32.totalorder %s27, 1
      %p155 = scmp.ne.s32.totalorder %s150, %s152
      %p156 = scmp.eq.s32.totalorder %s27, 0
      %p157 = por %p155, %p156
      %p158 = scmp.ne.s32.totalorder %s150, %s152
      %p159 = scmp.eq.s32.totalorder %s32, 1
      %p160 = por %p158, %p159
      %p161 = scmp.ne.s32.totalorder %s152, %s153
      %p162 = scmp.eq.s32.totalorder %s32, 0
      %p163 = por %p161, %p162
      %p164 = scmp.ne.s32.totalorder %s152, %s153
      %p165 = scmp.eq.s32.totalorder %s33, 1
      %p166 = por %p164, %p165
      %p168 = scmp.ne.s32.totalorder %s153, %s167
      %p169 = scmp.eq.s32.totalorder %s33, 0
      %p170 = por %p168, %p169
      %s171 = ssub.s32 %s27, %s34
      %p172 = scmp.eq.s32.totalorder %s171, 0
      %s174 = sadd.s32 %s173, 1
      %s175 = scalar_select %p172, %s173, %s174
      %p178 = pneg %p172
      %p179 = scmp.eq.s32.totalorder %s27, 1
      %p180 = por %p178, %p179
      %p181 = scmp.ne.s32.totalorder %s173, %s176
      %p182 = scmp.eq.s32.totalorder %s27, 0
      %p183 = por %p181, %p182
      %p184 = scmp.ne.s32.totalorder %s173, %s176
      %p185 = scmp.eq.s32.totalorder %s32, 1
      %p186 = por %p184, %p185
      %p187 = scmp.ne.s32.totalorder %s176, %s177
      %p188 = scmp.eq.s32.totalorder %s32, 0
      %p189 = por %p187, %p188
      %p190 = scmp.ne.s32.totalorder %s176, %s177
      %p191 = scmp.eq.s32.totalorder %s33, 1
      %p192 = por %p190, %p191
      %p194 = scmp.ne.s32.totalorder %s177, %s193
      %p195 = scmp.eq.s32.totalorder %s33, 0
      %p196 = por %p194, %p195
      %s197 = ssub.s32 %s27, %s34
      %p198 = scmp.eq.s32.totalorder %s197, 0
      %s200 = sadd.s32 %s199, 1
      %s201 = scalar_select %p198, %s199, %s200
      %p204 = pneg %p198
      %p205 = scmp.eq.s32.totalorder %s27, 1
      %p206 = por %p204, %p205
      %p207 = scmp.ne.s32.totalorder %s199, %s202
      %p208 = scmp.eq.s32.totalorder %s27, 0
      %p209 = por %p207, %p208
      %p210 = scmp.ne.s32.totalorder %s199, %s202
      %p211 = scmp.eq.s32.totalorder %s32, 1
      %p212 = por %p210, %p211
      %p213 = scmp.ne.s32.totalorder %s202, %s203
      %p214 = scmp.eq.s32.totalorder %s32, 0
      %p215 = por %p213, %p214
      %p216 = scmp.ne.s32.totalorder %s202, %s203
      %p217 = scmp.eq.s32.totalorder %s33, 1
      %p218 = por %p216, %p217
      %p220 = scmp.ne.s32.totalorder %s203, %s219
      %p221 = scmp.eq.s32.totalorder %s33, 0
      %p222 = por %p220, %p221
      %p223 = scmp.le.s32.totalorder 1, %s27
      %p224 = scmp.lt.s32.totalorder %s27, 3
      %p225 = pnand %p223, %p224
      %p226 = pneg %p225
      // Predicated region
      $region9: #{tpu_custom_call.1} parent=5 // pred_check
        _
      $region10: #{tpu_custom_call.1} parent=5 // pred_check_branch
        %228 = sbr.rel (%p225) target = $region12
      $region11: #{tpu_custom_call.1} parent=5 // pred_region
        %s229 = ssub.s32 %s27, 1
        // Predicated region
        $region13: #{tpu_custom_call.1} parent=11 // pred_check
          %p230 = pneg %p100
        $region14: #{tpu_custom_call.1} parent=11 // pred_check_branch
          %232 = sbr.rel (%p230) target = $region16
        $region15: #{tpu_custom_call.1} parent=11 // pred_region
          %234 = vsyncadd [#allocation6], 0
          %s235 = sshll.u32 %s2, 4
          %s236 = int_to_ptr.hbm [resolvable:$true] %s235
          %s237 = sshll.u32 [#allocation7], 4
          %s238 = int_to_ptr.vmem [resolvable:$true] %s237
          %243 = dma.hbm_to_vmem [thread:$0]  %s236, 512, %s238, [#allocation6], 128, 128, 8
        $region16: #{tpu_custom_call.1} parent=11 // pred_fallthru
          _
        // Predicated region
        $region17: #{tpu_custom_call.1} parent=11 // pred_check
          %p244 = pneg %p121
        $region18: #{tpu_custom_call.1} parent=11 // pred_check_branch
          %246 = sbr.rel (%p244) target = $region20
        $region19: #{tpu_custom_call.1} parent=11 // pred_region
          _
        $region20: #{tpu_custom_call.1} parent=11 // pred_fallthru
          _
        // Predicated region
        $region21: #{tpu_custom_call.1} parent=11 // pred_check
          %p247 = pneg %p142
        $region22: #{tpu_custom_call.1} parent=11 // pred_check_branch
          %249 = sbr.rel (%p247) target = $region24
        $region23: #{tpu_custom_call.1} parent=11 // pred_region
          %251 = vsyncadd [#allocation9], 0
          %s252 = sshll.u32 %s4, 4
          %s253 = int_to_ptr.hbm [resolvable:$true] %s252
          %s254 = sshll.u32 [#allocation8], 4
          %s255 = int_to_ptr.vmem [resolvable:$true] %s254
          %260 = dma.hbm_to_vmem [thread:$0]  %s253, 512, %s255, [#allocation9], 128, 128, 8
        $region24: #{tpu_custom_call.1} parent=11 // pred_fallthru
          _
        // Predicated region
        $region25: #{tpu_custom_call.1} parent=11 // pred_check
          %p261 = pneg %p163
        $region26: #{tpu_custom_call.1} parent=11 // pred_check_branch
          %263 = sbr.rel (%p261) target = $region28
        $region27: #{tpu_custom_call.1} parent=11 // pred_region
          _
        $region28: #{tpu_custom_call.1} parent=11 // pred_fallthru
          _
      $region12: #{tpu_custom_call.1} parent=5 // pred_fallthru
        _
      %p264 = scmp.lt.s32.totalorder %s27, 2
      // Predicated region
      $region29: #{tpu_custom_call.1} parent=5 // pred_check
        %p265 = pneg %p264
      $region30: #{tpu_custom_call.1} parent=5 // pred_check_branch
        %267 = sbr.rel (%p265) target = $region32
      $region31: #{tpu_custom_call.1} parent=5 // pred_region
        // Predicated region
        $region33: #{tpu_custom_call.1} parent=31 // pred_check
          %p268 = pneg %p47
        $region34: #{tpu_custom_call.1} parent=31 // pred_check_branch
          %270 = sbr.rel (%p268) target = $region36
        $region35: #{tpu_custom_call.1} parent=31 // pred_region
          %s271 = sand.u32 %s37, 1
          %s272 = scalar_lea.sflag [#allocation3], %s271
          %s273 = sand.u32 %s37, 1
          %s274 = smul.addr %s273, 32
          %s275 = scalar_lea.vmem [#allocation2], %s274
          %s276 = smul.u32 4, %s27
          %278 = vsyncadd %s272, 0
          %s279 = smul.addr %s276, 8
          %s280 = scalar_lea.hbm %s0, %s279
          %s281 = sshll.u32 %s280, 4
          %s282 = int_to_ptr.hbm [resolvable:$true] %s281
          %s283 = sshll.u32 %s275, 4
          %s284 = int_to_ptr.vmem [resolvable:$true] %s283
          %289 = dma.hbm_to_vmem [thread:$0]  %s282, 512, %s284, %s272, 128, 128, 8
        $region36: #{tpu_custom_call.1} parent=31 // pred_fallthru
          _
        // Predicated region
        $region37: #{tpu_custom_call.1} parent=31 // pred_check
          %p290 = pneg %p73
        $region38: #{tpu_custom_call.1} parent=31 // pred_check_branch
          %292 = sbr.rel (%p290) target = $region40
        $region39: #{tpu_custom_call.1} parent=31 // pred_region
          %s293 = sand.u32 %s27, 1
          %s294 = scalar_lea.sflag [#allocation6], %s293
          %s295 = sand.u32 %s63, 1
          %s296 = smul.addr %s295, 64
          %s297 = scalar_lea.vmem [#allocation5], %s296
          %s298 = smul.u32 4, %s27
          %300 = vsyncadd %s294, 0
          %s301 = smul.addr %s298, 2
          %s302 = smul.addr %s301, 8
          %s303 = scalar_lea.hbm %s1, %s302
          %s304 = sshll.u32 %s303, 4
          %s305 = int_to_ptr.hbm [resolvable:$true] %s304
          %s306 = sshll.u32 %s297, 4
          %s307 = int_to_ptr.vmem [resolvable:$true] %s306
          %312 = dma.hbm_to_vmem [thread:$0]  %s305, 1024, %s307, %s294, 128, 128, 8
        $region40: #{tpu_custom_call.1} parent=31 // pred_fallthru
          _
      $region32: #{tpu_custom_call.1} parent=5 // pred_fallthru
        _
      %p313 = scmp.le.s32.totalorder 1, %s27
      %p314 = scmp.lt.s32.totalorder %s27, 3
      %p315 = pnand %p313, %p314
      %p316 = pneg %p315
      // Predicated region
      $region41: #{tpu_custom_call.1} parent=5 // pred_check
        _
      $region42: #{tpu_custom_call.1} parent=5 // pred_check_branch
        %318 = sbr.rel (%p315) target = $region44
      $region43: #{tpu_custom_call.1} parent=5 // pred_region
        %s319 = ssub.s32 %s27, 1
        %s320 = sand.u32 %s40, 1
        %s321 = scalar_lea.sflag [#allocation3], %s320
        %s322 = sand.u32 %s40, 1
        %s323 = smul.addr %s322, 32
        %s324 = scalar_lea.vmem [#allocation2], %s323
        // Predicated region
        $region45: #{tpu_custom_call.1} parent=43 // pred_check
          %p325 = pneg %p53
        $region46: #{tpu_custom_call.1} parent=43 // pred_check_branch
          %327 = sbr.rel (%p325) target = $region48
        $region47: #{tpu_custom_call.1} parent=43 // pred_region
          %329 = dma.done %s321, 512
        $region48: #{tpu_custom_call.1} parent=43 // pred_fallthru
          _
        %s330 = sand.u32 %s32, 1
        %s331 = scalar_lea.sflag [#allocation6], %s330
        %s332 = sand.u32 %s66, 1
        %s333 = smul.addr %s332, 64
        %s334 = scalar_lea.vmem [#allocation5], %s333
        // Predicated region
        $region49: #{tpu_custom_call.1} parent=43 // pred_check
          %p335 = pneg %p79
        $region50: #{tpu_custom_call.1} parent=43 // pred_check_branch
          %337 = sbr.rel (%p335) target = $region52
        $region51: #{tpu_custom_call.1} parent=43 // pred_region
          %339 = dma.done %s331, 1024
        $region52: #{tpu_custom_call.1} parent=43 // pred_fallthru
          _
        // Predicated region
        $region53: #{tpu_custom_call.1} parent=43 // pred_check
          %p340 = pneg %p100
        $region54: #{tpu_custom_call.1} parent=43 // pred_check_branch
          %342 = sbr.rel (%p340) target = $region56
        $region55: #{tpu_custom_call.1} parent=43 // pred_region
          %344 = dma.done [#allocation6], 512
        $region56: #{tpu_custom_call.1} parent=43 // pred_fallthru
          _
        // Predicated region
        $region57: #{tpu_custom_call.1} parent=43 // pred_check
          %p345 = pneg %p142
        $region58: #{tpu_custom_call.1} parent=43 // pred_check_branch
          %347 = sbr.rel (%p345) target = $region60
        $region59: #{tpu_custom_call.1} parent=43 // pred_region
          %349 = dma.done [#allocation9], 512
        $region60: #{tpu_custom_call.1} parent=43 // pred_fallthru
          _
        %s350 = sand.u32 %s40, 1
        %s351 = scalar_lea.sflag [#allocation3], %s350
        %s352 = sand.u32 %s40, 1
        %s353 = smul.addr %s352, 32
        %s354 = scalar_lea.vmem [#allocation2], %s353
        %p355 = pneg %p53
        %p356 = pneg %p50
        %s357 = sand.u32 %s32, 1
        %s358 = scalar_lea.sflag [#allocation6], %s357
        %s359 = sand.u32 %s66, 1
        %s360 = smul.addr %s359, 64
        %s361 = scalar_lea.vmem [#allocation5], %s360
        %p362 = pneg %p79
        %p363 = pneg %p76
        %p364 = pneg %p100
        %p365 = pneg %p97
        %p366 = pneg %p121
        %p367 = pneg %p118
        %p368 = pneg %p142
        %p369 = pneg %p139
        %p370 = pneg %p163
        %p371 = pneg %p160
        %p372 = pneg %p189
        %p373 = pneg %p186
        %s374 = sand.u32 %s176, 1
        %s375 = scalar_lea.sflag [#allocation4], %s374
        %s376 = sand.u32 %s176, 1
        %s377 = smul.addr %s376, 32
        %s378 = scalar_lea.vmem [#allocation10], %s377
        %p379 = pneg %p215
        %p380 = pneg %p212
        %s381 = sand.u32 %s202, 1
        %s382 = scalar_lea.sflag [#allocation12], %s381
        %s383 = sand.u32 %s202, 1
        %s384 = smul.addr %s383, 64
        %s385 = scalar_lea.vmem [#allocation11], %s384
        %s386 = smul.u32 4, %s32
        %s387 = smul.u32 4, %s32
        %s388 = smul.u32 4, %s32
        %s389 = smul.u32 4, %s32
        %v390 = vld [vmem:[%s324] sm:$0xff]
        %v391 = vld [vmem:[%s324 + $0x8] sm:$0xff]
        %v392 = vld [vmem:[%s324 + $0x10] sm:$0xff]
        %v393 = vld [vmem:[%s324 + $0x18] sm:$0xff]
        %v394 = vld [vmem:[%s334] sm:$0xff]
        %v395 = vld [vmem:[%s334 + $0x8] sm:$0xff]
        %v396 = vld [vmem:[%s334 + $0x10] sm:$0xff]
        %v397 = vld [vmem:[%s334 + $0x18] sm:$0xff]
        %v398 = vld [vmem:[%s334 + $0x20] sm:$0xff]
        %v399 = vld [vmem:[%s334 + $0x28] sm:$0xff]
        %v400 = vld [vmem:[%s334 + $0x30] sm:$0xff]
        %v401 = vld [vmem:[%s334 + $0x38] sm:$0xff]
        %v402 = vld [vmem:[#allocation7] sm:$0xff]
        %v403 = vld [vmem:[#allocation7 + $0x8] sm:$0xff]
        %v404 = vld [vmem:[#allocation7 + $0x10] sm:$0xff]
        %v405 = vld [vmem:[#allocation7 + $0x18] sm:$0xff]
        %v406 = vld [vmem:[#allocation8] sm:$0xff]
        %v407 = vld [vmem:[#allocation8 + $0x8] sm:$0xff]
        %v408 = vld [vmem:[#allocation8 + $0x10] sm:$0xff]
        %v409 = vld [vmem:[#allocation8 + $0x18] sm:$0xff]
        %v410 = vld [vmem:[%s3] sm:$0x1]
        %v411 = vld [vmem:[%s5] sm:$0x1]
        %v413 = vperm.slane %v410, 0
        %vm415 = vcmask 261120
        %v417 = vsel %vm415, %v390, 0
        %v420 = vsel %vm415, %v391, 0
        %v423 = vsel %vm415, %v392, 0
        %v426 = vsel %vm415, %v393, 0
        %v429 = vsel %vm415, %v394, 0
        %v432 = vsel %vm415, %v395, 0
        %v435 = vsel %vm415, %v396, 0
        %v438 = vsel %vm415, %v397, 0
        %v441 = vsel %vm415, %v398, 0
        %v444 = vsel %vm415, %v399, 0
        %v447 = vsel %vm415, %v400, 0
        %v450 = vsel %vm415, %v401, 0
        %452 = vmatpush.msra.mxu0 0.0
        %453 = vmatpush.msra.mxu0 0.0
        %454 = vmatpush.msra.mxu0 0.0
        %455 = vmatpush.msra.mxu0 0.0
        %456 = vmatpush.msra.mxu0 0.0
        %457 = vmatpush.msra.mxu0 0.0
        %458 = vmatpush.msra.mxu0 0.0
        %459 = vmatpush.msra.mxu0 0.0
        %460 = vmatpush.msra.mxu0 0.0
        %461 = vmatpush.msra.mxu0 0.0
        %462 = vmatpush.msra.mxu0 0.0
        %463 = vmatpush.msra.mxu0 0.0
        %464 = vmatpush.msra.mxu0 %v405
        %465 = vmatpush.msra.mxu0 %v404
        %466 = vmatpush.msra.mxu0 %v403
        %467 = vmatpush.msra.mxu0 %v402
        %468 = vmatmul.f32.gmra.mxu0 %v417
        %v469 = vpop.f32.mrf.mxu0
        %v470 = vadd.f32 %v413, %v469
        %471 = vmatmul.f32.gmra.mxu0 %v420
        %v472 = vpop.f32.mrf.mxu0
        %v473 = vadd.f32 %v413, %v472
        %474 = vmatmul.f32.gmra.mxu0 %v423
        %v475 = vpop.f32.mrf.mxu0
        %v476 = vadd.f32 %v413, %v475
        %477 = vmatmul.f32.gmra.mxu0 %v426
        %v478 = vpop.f32.mrf.mxu0
        %v479 = vadd.f32 %v413, %v478
        %480 = vmatmul.f32.gmra.mxu0 %v429
        %v481 = vpop.f32.mrf.mxu0
        %v482 = vadd.f32 %v413, %v481
        %483 = vmatmul.f32.gmra.mxu0 %v432
        %v484 = vpop.f32.mrf.mxu0
        %v485 = vadd.f32 %v413, %v484
        %486 = vmatmul.f32.gmra.mxu0 %v435
        %v487 = vpop.f32.mrf.mxu0
        %v488 = vadd.f32 %v413, %v487
        %489 = vmatmul.f32.gmra.mxu0 %v438
        %v490 = vpop.f32.mrf.mxu0
        %v491 = vadd.f32 %v413, %v490
        %492 = vmatmul.f32.gmra.mxu0 %v441
        %v493 = vpop.f32.mrf.mxu0
        %v494 = vadd.f32 %v413, %v493
        %495 = vmatmul.f32.gmra.mxu0 %v444
        %v496 = vpop.f32.mrf.mxu0
        %v497 = vadd.f32 %v413, %v496
        %498 = vmatmul.f32.gmra.mxu0 %v447
        %v499 = vpop.f32.mrf.mxu0
        %v500 = vadd.f32 %v413, %v499
        %501 = vmatmul.f32.gmra.mxu0 %v450
        %v502 = vpop.f32.mrf.mxu0
        %v503 = vadd.f32 %v413, %v502
        %504 = vdwg.mxu0
        %v505 = vmax.f32 %v470, 0.0
        %v506 = vmax.f32 %v473, 0.0
        %v507 = vmax.f32 %v476, 0.0
        %v508 = vmax.f32 %v479, 0.0
        %v509 = vmax.f32 %v482, 0.0
        %v510 = vmax.f32 %v485, 0.0
        %v511 = vmax.f32 %v488, 0.0
        %v512 = vmax.f32 %v491, 0.0
        %v513 = vmax.f32 %v494, 0.0
        %v514 = vmax.f32 %v497, 0.0
        %v515 = vmax.f32 %v500, 0.0
        %v516 = vmax.f32 %v503, 0.0
        %v518 = vperm.slane %v411, 0
        %v521 = vsel %vm415, %v505, 0
        %v524 = vsel %vm415, %v506, 0
        %v527 = vsel %vm415, %v507, 0
        %v530 = vsel %vm415, %v508, 0
        %v533 = vsel %vm415, %v509, 0
        %v536 = vsel %vm415, %v510, 0
        %v539 = vsel %vm415, %v511, 0
        %v542 = vsel %vm415, %v512, 0
        %v545 = vsel %vm415, %v513, 0
        %v548 = vsel %vm415, %v514, 0
        %v551 = vsel %vm415, %v515, 0
        %v554 = vsel %vm415, %v516, 0
        %556 = vmatpush.msra.mxu0 0.0
        %557 = vmatpush.msra.mxu0 0.0
        %558 = vmatpush.msra.mxu0 0.0
        %559 = vmatpush.msra.mxu0 0.0
        %560 = vmatpush.msra.mxu0 0.0
        %561 = vmatpush.msra.mxu0 0.0
        %562 = vmatpush.msra.mxu0 0.0
        %563 = vmatpush.msra.mxu0 0.0
        %564 = vmatpush.msra.mxu0 0.0
        %565 = vmatpush.msra.mxu0 0.0
        %566 = vmatpush.msra.mxu0 0.0
        %567 = vmatpush.msra.mxu0 0.0
        %568 = vmatpush.msra.mxu0 %v409
        %569 = vmatpush.msra.mxu0 %v408
        %570 = vmatpush.msra.mxu0 %v407
        %571 = vmatpush.msra.mxu0 %v406
        %572 = vmatmul.f32.gmra.mxu0 %v521
        %v573 = vpop.f32.mrf.mxu0
        %v574 = vadd.f32 %v518, %v573
        %575 = vmatmul.f32.gmra.mxu0 %v524
        %v576 = vpop.f32.mrf.mxu0
        %v577 = vadd.f32 %v518, %v576
        %578 = vmatmul.f32.gmra.mxu0 %v527
        %v579 = vpop.f32.mrf.mxu0
        %v580 = vadd.f32 %v518, %v579
        %581 = vmatmul.f32.gmra.mxu0 %v530
        %v582 = vpop.f32.mrf.mxu0
        %v583 = vadd.f32 %v518, %v582
        %584 = vmatmul.f32.gmra.mxu0 %v533
        %v585 = vpop.f32.mrf.mxu0
        %v586 = vadd.f32 %v518, %v585
        %587 = vmatmul.f32.gmra.mxu0 %v536
        %v588 = vpop.f32.mrf.mxu0
        %v589 = vadd.f32 %v518, %v588
        %590 = vmatmul.f32.gmra.mxu0 %v539
        %v591 = vpop.f32.mrf.mxu0
        %v592 = vadd.f32 %v518, %v591
        %593 = vmatmul.f32.gmra.mxu0 %v542
        %v594 = vpop.f32.mrf.mxu0
        %v595 = vadd.f32 %v518, %v594
        %596 = vmatmul.f32.gmra.mxu0 %v545
        %v597 = vpop.f32.mrf.mxu0
        %v598 = vadd.f32 %v518, %v597
        %599 = vmatmul.f32.gmra.mxu0 %v548
        %v600 = vpop.f32.mrf.mxu0
        %v601 = vadd.f32 %v518, %v600
        %602 = vmatmul.f32.gmra.mxu0 %v551
        %v603 = vpop.f32.mrf.mxu0
        %v604 = vadd.f32 %v518, %v603
        %605 = vmatmul.f32.gmra.mxu0 %v554
        %v606 = vpop.f32.mrf.mxu0
        %v607 = vadd.f32 %v518, %v606
        %608 = vdwg.mxu0
        %v609 = vmax.f32 %v574, 0.0
        %v610 = vmax.f32 %v577, 0.0
        %v611 = vmax.f32 %v580, 0.0
        %v612 = vmax.f32 %v583, 0.0
        %v613 = vmax.f32 %v586, 0.0
        %v614 = vmax.f32 %v589, 0.0
        %v615 = vmax.f32 %v592, 0.0
        %v616 = vmax.f32 %v595, 0.0
        %v617 = vmax.f32 %v598, 0.0
        %v618 = vmax.f32 %v601, 0.0
        %v619 = vmax.f32 %v604, 0.0
        %v620 = vmax.f32 %v607, 0.0
        %v622 = vsel %vm415, %v609, 0
        %v625 = vsel %vm415, %v613, 0
        %v628 = vsel %vm415, %v614, 0
        %630 = vmatpush.xpose.msra.mxu0 0.0
        %631 = vmatpush.xpose.msra.mxu0 0.0
        %632 = vmatpush.xpose.msra.mxu0 0.0
        %633 = vmatpush.xpose.msra.mxu0 0.0
        %634 = vmatpush.xpose.msra.mxu0 0.0
        %635 = vmatpush.xpose.msra.mxu0 0.0
        %636 = vmatpush.xpose.msra.mxu0 0.0
        %637 = vmatpush.xpose.msra.mxu0 0.0
        %638 = vmatpush.xpose.msra.mxu0 0.0
        %639 = vmatpush.xpose.msra.mxu0 0.0
        %640 = vmatpush.xpose.msra.mxu0 0.0
        %641 = vmatpush.xpose.msra.mxu0 0.0
        %642 = vmatpush.xpose.msra.mxu0 0.0
        %643 = vmatpush.xpose.msra.mxu0 0.0
        %644 = vmatpush.xpose.msra.mxu0 %v628
        %645 = vmatpush.xpose.msra.mxu0 %v625
        %646 = vmatmul.f32.gmra.mxu0 %v622
        %v647 = vpop.f32.mrf.mxu0
        %v648 = vadd.f32 0.0, %v647
        %649 = vdwg.mxu0
        %v651 = vsel %vm415, %v610, 0
        %v654 = vsel %vm415, %v615, 0
        %v657 = vsel %vm415, %v616, 0
        %659 = vmatpush.xpose.msra.mxu0 0.0
        %660 = vmatpush.xpose.msra.mxu0 0.0
        %661 = vmatpush.xpose.msra.mxu0 0.0
        %662 = vmatpush.xpose.msra.mxu0 0.0
        %663 = vmatpush.xpose.msra.mxu0 0.0
        %664 = vmatpush.xpose.msra.mxu0 0.0
        %665 = vmatpush.xpose.msra.mxu0 0.0
        %666 = vmatpush.xpose.msra.mxu0 0.0
        %667 = vmatpush.xpose.msra.mxu0 0.0
        %668 = vmatpush.xpose.msra.mxu0 0.0
        %669 = vmatpush.xpose.msra.mxu0 0.0
        %670 = vmatpush.xpose.msra.mxu0 0.0
        %671 = vmatpush.xpose.msra.mxu0 0.0
        %672 = vmatpush.xpose.msra.mxu0 0.0
        %673 = vmatpush.xpose.msra.mxu0 %v657
        %674 = vmatpush.xpose.msra.mxu0 %v654
        %675 = vmatmul.f32.gmra.mxu0 %v651
        %v676 = vpop.f32.mrf.mxu0
        %v677 = vadd.f32 0.0, %v676
        %678 = vdwg.mxu0
        %v680 = vsel %vm415, %v611, 0
        %v683 = vsel %vm415, %v617, 0
        %v686 = vsel %vm415, %v618, 0
        %688 = vmatpush.xpose.msra.mxu0 0.0
        %689 = vmatpush.xpose.msra.mxu0 0.0
        %690 = vmatpush.xpose.msra.mxu0 0.0
        %691 = vmatpush.xpose.msra.mxu0 0.0
        %692 = vmatpush.xpose.msra.mxu0 0.0
        %693 = vmatpush.xpose.msra.mxu0 0.0
        %694 = vmatpush.xpose.msra.mxu0 0.0
        %695 = vmatpush.xpose.msra.mxu0 0.0
        %696 = vmatpush.xpose.msra.mxu0 0.0
        %697 = vmatpush.xpose.msra.mxu0 0.0
        %698 = vmatpush.xpose.msra.mxu0 0.0
        %699 = vmatpush.xpose.msra.mxu0 0.0
        %700 = vmatpush.xpose.msra.mxu0 0.0
        %701 = vmatpush.xpose.msra.mxu0 0.0
        %702 = vmatpush.xpose.msra.mxu0 %v686
        %703 = vmatpush.xpose.msra.mxu0 %v683
        %704 = vmatmul.f32.gmra.mxu0 %v680
        %v705 = vpop.f32.mrf.mxu0
        %v706 = vadd.f32 0.0, %v705
        %707 = vdwg.mxu0
        %v709 = vsel %vm415, %v612, 0
        %v712 = vsel %vm415, %v619, 0
        %v715 = vsel %vm415, %v620, 0
        %717 = vmatpush.xpose.msra.mxu0 0.0
        %718 = vmatpush.xpose.msra.mxu0 0.0
        %719 = vmatpush.xpose.msra.mxu0 0.0
        %720 = vmatpush.xpose.msra.mxu0 0.0
        %721 = vmatpush.xpose.msra.mxu0 0.0
        %722 = vmatpush.xpose.msra.mxu0 0.0
        %723 = vmatpush.xpose.msra.mxu0 0.0
        %724 = vmatpush.xpose.msra.mxu0 0.0
        %725 = vmatpush.xpose.msra.mxu0 0.0
        %726 = vmatpush.xpose.msra.mxu0 0.0
        %727 = vmatpush.xpose.msra.mxu0 0.0
        %728 = vmatpush.xpose.msra.mxu0 0.0
        %729 = vmatpush.xpose.msra.mxu0 0.0
        %730 = vmatpush.xpose.msra.mxu0 0.0
        %731 = vmatpush.xpose.msra.mxu0 %v715
        %732 = vmatpush.xpose.msra.mxu0 %v712
        %733 = vmatmul.f32.gmra.mxu0 %v709
        %v734 = vpop.f32.mrf.mxu0
        %v735 = vadd.f32 0.0, %v734
        %736 = vdwg.mxu0
        %vm737 = vcmask 130048
        %v738 = vsel %vm737, %v648, -inf
        %739 = vmax.xlane.f32.xlu0 %v738
        %v740 = vpop.xlane.xlu0 %739
        %v741 = vsel %vm737, %v677, -inf
        %742 = vmax.xlane.f32.xlu0 %v741
        %v743 = vpop.xlane.xlu0 %742
        %v744 = vsel %vm737, %v706, -inf
        %745 = vmax.xlane.f32.xlu0 %v744
        %v746 = vpop.xlane.xlu0 %745
        %v747 = vsel %vm737, %v735, -inf
        %748 = vmax.xlane.f32.xlu0 %v747
        %v749 = vpop.xlane.xlu0 %748
        %v750 = vsub.f32 %v648, %v740
        %v751 = vsub.f32 %v677, %v743
        %v752 = vsub.f32 %v706, %v746
        %v753 = vsub.f32 %v735, %v749
        %v754 = vmul.f32 %v750, 1.442695
        %v755 = vpow.pop %v754
        %v756 = vmul.f32 %v751, 1.442695
        %v757 = vpow.pop %v756
        %v758 = vmul.f32 %v752, 1.442695
        %v759 = vpow.pop %v758
        %v760 = vmul.f32 %v753, 1.442695
        %v761 = vpow.pop %v760
        %v762 = vsel %vm737, %v755, 0.0
        %763 = vadd.xlane.f32.xlu0 %v762
        %v764 = vpop.xlane.xlu0 %763
        %v765 = vsel %vm737, %v757, 0.0
        %766 = vadd.xlane.f32.xlu0 %v765
        %v767 = vpop.xlane.xlu0 %766
        %v768 = vsel %vm737, %v759, 0.0
        %769 = vadd.xlane.f32.xlu0 %v768
        %v770 = vpop.xlane.xlu0 %769
        %v771 = vsel %vm737, %v761, 0.0
        %772 = vadd.xlane.f32.xlu0 %v771
        %v773 = vpop.xlane.xlu0 %772
        %v774 = vrcp.pop %v764
        %v775 = vrcp.pop %v767
        %v776 = vrcp.pop %v770
        %v777 = vrcp.pop %v773
        %v778 = vmul.f32 %v755, %v774
        %v779 = vmul.f32 %v757, %v775
        %v780 = vmul.f32 %v759, %v776
        %v781 = vmul.f32 %v761, %v777
        %v783 = vsel %vm737, %v778, 0
        %785 = vmatpush.msra.mxu0 0.0
        %786 = vmatpush.msra.mxu0 0.0
        %787 = vmatpush.msra.mxu0 0.0
        %788 = vmatpush.msra.mxu0 0.0
        %789 = vmatpush.msra.mxu0 0.0
        %790 = vmatpush.msra.mxu0 0.0
        %791 = vmatpush.msra.mxu0 0.0
        %792 = vmatpush.msra.mxu0 0.0
        %793 = vmatpush.msra.mxu0 0.0
        %794 = vmatpush.msra.mxu0 0.0
        %795 = vmatpush.msra.mxu0 0.0
        %796 = vmatpush.msra.mxu0 0.0
        %797 = vmatpush.msra.mxu0 0.0
        %798 = vmatpush.msra.mxu0 0.0
        %799 = vmatpush.msra.mxu0 %v395
        %800 = vmatpush.msra.mxu0 %v394
        %801 = vmatmul.f32.gmra.mxu0 %v783
        %v802 = vpop.f32.mrf.mxu0
        %v803 = vadd.f32 0.0, %v802
        %804 = vdwg.mxu0
        %v806 = vsel %vm737, %v779, 0
        %808 = vmatpush.msra.mxu0 0.0
        %809 = vmatpush.msra.mxu0 0.0
        %810 = vmatpush.msra.mxu0 0.0
        %811 = vmatpush.msra.mxu0 0.0
        %812 = vmatpush.msra.mxu0 0.0
        %813 = vmatpush.msra.mxu0 0.0
        %814 = vmatpush.msra.mxu0 0.0
        %815 = vmatpush.msra.mxu0 0.0
        %816 = vmatpush.msra.mxu0 0.0
        %817 = vmatpush.msra.mxu0 0.0
        %818 = vmatpush.msra.mxu0 0.0
        %819 = vmatpush.msra.mxu0 0.0
        %820 = vmatpush.msra.mxu0 0.0
        %821 = vmatpush.msra.mxu0 0.0
        %822 = vmatpush.msra.mxu0 %v397
        %823 = vmatpush.msra.mxu0 %v396
        %824 = vmatmul.f32.gmra.mxu0 %v806
        %v825 = vpop.f32.mrf.mxu0
        %v826 = vadd.f32 0.0, %v825
        %827 = vdwg.mxu0
        %v829 = vsel %vm737, %v780, 0
        %831 = vmatpush.msra.mxu0 0.0
        %832 = vmatpush.msra.mxu0 0.0
        %833 = vmatpush.msra.mxu0 0.0
        %834 = vmatpush.msra.mxu0 0.0
        %835 = vmatpush.msra.mxu0 0.0
        %836 = vmatpush.msra.mxu0 0.0
        %837 = vmatpush.msra.mxu0 0.0
        %838 = vmatpush.msra.mxu0 0.0
        %839 = vmatpush.msra.mxu0 0.0
        %840 = vmatpush.msra.mxu0 0.0
        %841 = vmatpush.msra.mxu0 0.0
        %842 = vmatpush.msra.mxu0 0.0
        %843 = vmatpush.msra.mxu0 0.0
        %844 = vmatpush.msra.mxu0 0.0
        %845 = vmatpush.msra.mxu0 %v399
        %846 = vmatpush.msra.mxu0 %v398
        %847 = vmatmul.f32.gmra.mxu0 %v829
        %v848 = vpop.f32.mrf.mxu0
        %v849 = vadd.f32 0.0, %v848
        %850 = vdwg.mxu0
        %v852 = vsel %vm737, %v781, 0
        %854 = vmatpush.msra.mxu0 0.0
        %855 = vmatpush.msra.mxu0 0.0
        %856 = vmatpush.msra.mxu0 0.0
        %857 = vmatpush.msra.mxu0 0.0
        %858 = vmatpush.msra.mxu0 0.0
        %859 = vmatpush.msra.mxu0 0.0
        %860 = vmatpush.msra.mxu0 0.0
        %861 = vmatpush.msra.mxu0 0.0
        %862 = vmatpush.msra.mxu0 0.0
        %863 = vmatpush.msra.mxu0 0.0
        %864 = vmatpush.msra.mxu0 0.0
        %865 = vmatpush.msra.mxu0 0.0
        %866 = vmatpush.msra.mxu0 0.0
        %867 = vmatpush.msra.mxu0 0.0
        %868 = vmatpush.msra.mxu0 %v401
        %869 = vmatpush.msra.mxu0 %v400
        %870 = vmatmul.f32.gmra.mxu0 %v852
        %v871 = vpop.f32.mrf.mxu0
        %v872 = vadd.f32 0.0, %v871
        %873 = vdwg.mxu0
        %v874 = vrot.slane %v738, 4
        %v875 = vmax.f32 %v738, %v874
        %v876 = vrot.slane %v875, 2
        %v877 = vmax.f32 %v875, %v876
        %v878 = vrot.slane %v877, 1
        %v879 = vmax.f32 %v877, %v878
        %v880 = vrot.slane %v741, 4
        %v881 = vmax.f32 %v741, %v880
        %v882 = vrot.slane %v881, 2
        %v883 = vmax.f32 %v881, %v882
        %v884 = vrot.slane %v883, 1
        %v885 = vmax.f32 %v883, %v884
        %v886 = vrot.slane %v744, 4
        %v887 = vmax.f32 %v744, %v886
        %v888 = vrot.slane %v887, 2
        %v889 = vmax.f32 %v887, %v888
        %v890 = vrot.slane %v889, 1
        %v891 = vmax.f32 %v889, %v890
        %v892 = vrot.slane %v747, 4
        %v893 = vmax.f32 %v747, %v892
        %v894 = vrot.slane %v893, 2
        %v895 = vmax.f32 %v893, %v894
        %v896 = vrot.slane %v895, 1
        %v897 = vmax.f32 %v895, %v896
        %v898 = vsub.f32 %v648, %v879
        %v899 = vsub.f32 %v677, %v885
        %v900 = vsub.f32 %v706, %v891
        %v901 = vsub.f32 %v735, %v897
        %v902 = vmul.f32 %v898, 1.442695
        %v903 = vpow.pop %v902
        %v904 = vmul.f32 %v899, 1.442695
        %v905 = vpow.pop %v904
        %v906 = vmul.f32 %v900, 1.442695
        %v907 = vpow.pop %v906
        %v908 = vmul.f32 %v901, 1.442695
        %v909 = vpow.pop %v908
        %v910 = vsel %vm737, %v903, 0.0
        %v911 = vrot.slane %v910, 4
        %v912 = vadd.f32 %v910, %v911
        %v913 = vrot.slane %v912, 2
        %v914 = vadd.f32 %v912, %v913
        %v915 = vrot.slane %v914, 1
        %v916 = vadd.f32 %v914, %v915
        %v917 = vsel %vm737, %v905, 0.0
        %v918 = vrot.slane %v917, 4
        %v919 = vadd.f32 %v917, %v918
        %v920 = vrot.slane %v919, 2
        %v921 = vadd.f32 %v919, %v920
        %v922 = vrot.slane %v921, 1
        %v923 = vadd.f32 %v921, %v922
        %v924 = vsel %vm737, %v907, 0.0
        %v925 = vrot.slane %v924, 4
        %v926 = vadd.f32 %v924, %v925
        %v927 = vrot.slane %v926, 2
        %v928 = vadd.f32 %v926, %v927
        %v929 = vrot.slane %v928, 1
        %v930 = vadd.f32 %v928, %v929
        %v931 = vsel %vm737, %v909, 0.0
        %v932 = vrot.slane %v931, 4
        %v933 = vadd.f32 %v931, %v932
        %v934 = vrot.slane %v933, 2
        %v935 = vadd.f32 %v933, %v934
        %v936 = vrot.slane %v935, 1
        %v937 = vadd.f32 %v935, %v936
        %v938 = vrcp.pop %v916
        %v939 = vrcp.pop %v923
        %v940 = vrcp.pop %v930
        %v941 = vrcp.pop %v937
        %v942 = vmul.f32 %v903, %v938
        %v943 = vmul.f32 %v905, %v939
        %v944 = vmul.f32 %v907, %v940
        %v945 = vmul.f32 %v909, %v941
        %946 = vxpose.xlu0.b32.start [1/16] %v942, 128
        %947 = vxpose.xlu0.b32.cont [2/16] 0.0, 128
        %948 = vxpose.xlu0.b32.cont [3/16] 0.0, 128
        %949 = vxpose.xlu0.b32.cont [4/16] 0.0, 128
        %950 = vxpose.xlu0.b32.cont [5/16] 0.0, 128
        %951 = vxpose.xlu0.b32.cont [6/16] 0.0, 128
        %952 = vxpose.xlu0.b32.cont [7/16] 0.0, 128
        %953 = vxpose.xlu0.b32.cont [8/16] 0.0, 128
        %954 = vxpose.xlu0.b32.cont [9/16] 0.0, 128
        %955 = vxpose.xlu0.b32.cont [10/16] 0.0, 128
        %956 = vxpose.xlu0.b32.cont [11/16] 0.0, 128
        %957 = vxpose.xlu0.b32.cont [12/16] 0.0, 128
        %958 = vxpose.xlu0.b32.cont [13/16] 0.0, 128
        %959 = vxpose.xlu0.b32.cont [14/16] 0.0, 128
        %960 = vxpose.xlu0.b32.cont [15/16] 0.0, 128
        %961 = vxpose.xlu0.b32.end [16/16] 0.0, 128
        %v962 = vpop.trf.xlu0
        %v963 = vpop.trf.xlu0
        %v964 = vpop.trf.xlu0
        %v965 = vpop.trf.xlu0
        %v966 = vpop.trf.xlu0
        %v967 = vpop.trf.xlu0
        %v968 = vpop.trf.xlu0
        %v969 = vpop.trf.xlu0
        %v970 = vpop.trf.xlu0
        %v971 = vpop.trf.xlu0
        %v972 = vpop.trf.xlu0
        %v973 = vpop.trf.xlu0
        %v974 = vpop.trf.xlu0
        %v975 = vpop.trf.xlu0
        %v976 = vpop.trf.xlu0
        %v977 = vpop.trf.xlu0
        %vm978 = vcmask 64512
        %v980 = vsel %vm978, %v962, 0
        %v983 = vsel %vm978, %v963, 0
        %985 = vmatpush.msra.mxu0 0.0
        %986 = vmatpush.msra.mxu0 0.0
        %987 = vmatpush.msra.mxu0 0.0
        %988 = vmatpush.msra.mxu0 0.0
        %989 = vmatpush.msra.mxu0 0.0
        %990 = vmatpush.msra.mxu0 0.0
        %991 = vmatpush.msra.mxu0 0.0
        %992 = vmatpush.msra.mxu0 0.0
        %993 = vmatpush.msra.mxu0 0.0
        %994 = vmatpush.msra.mxu0 0.0
        %995 = vmatpush.msra.mxu0 0.0
        %996 = vmatpush.msra.mxu0 0.0
        %997 = vmatpush.msra.mxu0 0.0
        %998 = vmatpush.msra.mxu0 0.0
        %999 = vmatpush.msra.mxu0 0.0
        %1000 = vmatpush.msra.mxu0 %v390
        %1001 = vmatmul.f32.gmra.mxu0 %v980
        %v1002 = vpop.f32.mrf.mxu0
        %v1003 = vadd.f32 0.0, %v1002
        %1004 = vmatmul.f32.gmra.mxu0 %v983
        %v1005 = vpop.f32.mrf.mxu0
        %v1006 = vadd.f32 0.0, %v1005
        %1007 = vdwg.mxu0
        %1008 = vxpose.xlu0.b32.start [1/16] %v943, 128
        %1009 = vxpose.xlu0.b32.cont [2/16] 0.0, 128
        %1010 = vxpose.xlu0.b32.cont [3/16] 0.0, 128
        %1011 = vxpose.xlu0.b32.cont [4/16] 0.0, 128
        %1012 = vxpose.xlu0.b32.cont [5/16] 0.0, 128
        %1013 = vxpose.xlu0.b32.cont [6/16] 0.0, 128
        %1014 = vxpose.xlu0.b32.cont [7/16] 0.0, 128
        %1015 = vxpose.xlu0.b32.cont [8/16] 0.0, 128
        %1016 = vxpose.xlu0.b32.cont [9/16] 0.0, 128
        %1017 = vxpose.xlu0.b32.cont [10/16] 0.0, 128
        %1018 = vxpose.xlu0.b32.cont [11/16] 0.0, 128
        %1019 = vxpose.xlu0.b32.cont [12/16] 0.0, 128
        %1020 = vxpose.xlu0.b32.cont [13/16] 0.0, 128
        %1021 = vxpose.xlu0.b32.cont [14/16] 0.0, 128
        %1022 = vxpose.xlu0.b32.cont [15/16] 0.0, 128
        %1023 = vxpose.xlu0.b32.end [16/16] 0.0, 128
        %v1024 = vpop.trf.xlu0
        %v1025 = vpop.trf.xlu0
        %v1026 = vpop.trf.xlu0
        %v1027 = vpop.trf.xlu0
        %v1028 = vpop.trf.xlu0
        %v1029 = vpop.trf.xlu0
        %v1030 = vpop.trf.xlu0
        %v1031 = vpop.trf.xlu0
        %v1032 = vpop.trf.xlu0
        %v1033 = vpop.trf.xlu0
        %v1034 = vpop.trf.xlu0
        %v1035 = vpop.trf.xlu0
        %v1036 = vpop.trf.xlu0
        %v1037 = vpop.trf.xlu0
        %v1038 = vpop.trf.xlu0
        %v1039 = vpop.trf.xlu0
        %v1041 = vsel %vm978, %v1024, 0
        %v1044 = vsel %vm978, %v1025, 0
        %1046 = vmatpush.msra.mxu0 0.0
        %1047 = vmatpush.msra.mxu0 0.0
        %1048 = vmatpush.msra.mxu0 0.0
        %1049 = vmatpush.msra.mxu0 0.0
        %1050 = vmatpush.msra.mxu0 0.0
        %1051 = vmatpush.msra.mxu0 0.0
        %1052 = vmatpush.msra.mxu0 0.0
        %1053 = vmatpush.msra.mxu0 0.0
        %1054 = vmatpush.msra.mxu0 0.0
        %1055 = vmatpush.msra.mxu0 0.0
        %1056 = vmatpush.msra.mxu0 0.0
        %1057 = vmatpush.msra.mxu0 0.0
        %1058 = vmatpush.msra.mxu0 0.0
        %1059 = vmatpush.msra.mxu0 0.0
        %1060 = vmatpush.msra.mxu0 0.0
        %1061 = vmatpush.msra.mxu0 %v391
        %1062 = vmatmul.f32.gmra.mxu0 %v1041
        %v1063 = vpop.f32.mrf.mxu0
        %v1064 = vadd.f32 0.0, %v1063
        %1065 = vmatmul.f32.gmra.mxu0 %v1044
        %v1066 = vpop.f32.mrf.mxu0
        %v1067 = vadd.f32 0.0, %v1066
        %1068 = vdwg.mxu0
        %1069 = vxpose.xlu0.b32.start [1/16] %v944, 128
        %1070 = vxpose.xlu0.b32.cont [2/16] 0.0, 128
        %1071 = vxpose.xlu0.b32.cont [3/16] 0.0, 128
        %1072 = vxpose.xlu0.b32.cont [4/16] 0.0, 128
        %1073 = vxpose.xlu0.b32.cont [5/16] 0.0, 128
        %1074 = vxpose.xlu0.b32.cont [6/16] 0.0, 128
        %1075 = vxpose.xlu0.b32.cont [7/16] 0.0, 128
        %1076 = vxpose.xlu0.b32.cont [8/16] 0.0, 128
        %1077 = vxpose.xlu0.b32.cont [9/16] 0.0, 128
        %1078 = vxpose.xlu0.b32.cont [10/16] 0.0, 128
        %1079 = vxpose.xlu0.b32.cont [11/16] 0.0, 128
        %1080 = vxpose.xlu0.b32.cont [12/16] 0.0, 128
        %1081 = vxpose.xlu0.b32.cont [13/16] 0.0, 128
        %1082 = vxpose.xlu0.b32.cont [14/16] 0.0, 128
        %1083 = vxpose.xlu0.b32.cont [15/16] 0.0, 128
        %1084 = vxpose.xlu0.b32.end [16/16] 0.0, 128
        %v1085 = vpop.trf.xlu0
        %v1086 = vpop.trf.xlu0
        %v1087 = vpop.trf.xlu0
        %v1088 = vpop.trf.xlu0
        %v1089 = vpop.trf.xlu0
        %v1090 = vpop.trf.xlu0
        %v1091 = vpop.trf.xlu0
        %v1092 = vpop.trf.xlu0
        %v1093 = vpop.trf.xlu0
        %v1094 = vpop.trf.xlu0
        %v1095 = vpop.trf.xlu0
        %v1096 = vpop.trf.xlu0
        %v1097 = vpop.trf.xlu0
        %v1098 = vpop.trf.xlu0
        %v1099 = vpop.trf.xlu0
        %v1100 = vpop.trf.xlu0
        %v1102 = vsel %vm978, %v1085, 0
        %v1105 = vsel %vm978, %v1086, 0
        %1107 = vmatpush.msra.mxu0 0.0
        %1108 = vmatpush.msra.mxu0 0.0
        %1109 = vmatpush.msra.mxu0 0.0
        %1110 = vmatpush.msra.mxu0 0.0
        %1111 = vmatpush.msra.mxu0 0.0
        %1112 = vmatpush.msra.mxu0 0.0
        %1113 = vmatpush.msra.mxu0 0.0
        %1114 = vmatpush.msra.mxu0 0.0
        %1115 = vmatpush.msra.mxu0 0.0
        %1116 = vmatpush.msra.mxu0 0.0
        %1117 = vmatpush.msra.mxu0 0.0
        %1118 = vmatpush.msra.mxu0 0.0
        %1119 = vmatpush.msra.mxu0 0.0
        %1120 = vmatpush.msra.mxu0 0.0
        %1121 = vmatpush.msra.mxu0 0.0
        %1122 = vmatpush.msra.mxu0 %v392
        %1123 = vmatmul.f32.gmra.mxu0 %v1102
        %v1124 = vpop.f32.mrf.mxu0
        %v1125 = vadd.f32 0.0, %v1124
        %1126 = vmatmul.f32.gmra.mxu0 %v1105
        %v1127 = vpop.f32.mrf.mxu0
        %v1128 = vadd.f32 0.0, %v1127
        %1129 = vdwg.mxu0
        %1130 = vxpose.xlu0.b32.start [1/16] %v945, 128
        %1131 = vxpose.xlu0.b32.cont [2/16] 0.0, 128
        %1132 = vxpose.xlu0.b32.cont [3/16] 0.0, 128
        %1133 = vxpose.xlu0.b32.cont [4/16] 0.0, 128
        %1134 = vxpose.xlu0.b32.cont [5/16] 0.0, 128
        %1135 = vxpose.xlu0.b32.cont [6/16] 0.0, 128
        %1136 = vxpose.xlu0.b32.cont [7/16] 0.0, 128
        %1137 = vxpose.xlu0.b32.cont [8/16] 0.0, 128
        %1138 = vxpose.xlu0.b32.cont [9/16] 0.0, 128
        %1139 = vxpose.xlu0.b32.cont [10/16] 0.0, 128
        %1140 = vxpose.xlu0.b32.cont [11/16] 0.0, 128
        %1141 = vxpose.xlu0.b32.cont [12/16] 0.0, 128
        %1142 = vxpose.xlu0.b32.cont [13/16] 0.0, 128
        %1143 = vxpose.xlu0.b32.cont [14/16] 0.0, 128
        %1144 = vxpose.xlu0.b32.cont [15/16] 0.0, 128
        %1145 = vxpose.xlu0.b32.end [16/16] 0.0, 128
        %v1146 = vpop.trf.xlu0
        %v1147 = vpop.trf.xlu0
        %v1148 = vpop.trf.xlu0
        %v1149 = vpop.trf.xlu0
        %v1150 = vpop.trf.xlu0
        %v1151 = vpop.trf.xlu0
        %v1152 = vpop.trf.xlu0
        %v1153 = vpop.trf.xlu0
        %v1154 = vpop.trf.xlu0
        %v1155 = vpop.trf.xlu0
        %v1156 = vpop.trf.xlu0
        %v1157 = vpop.trf.xlu0
        %v1158 = vpop.trf.xlu0
        %v1159 = vpop.trf.xlu0
        %v1160 = vpop.trf.xlu0
        %v1161 = vpop.trf.xlu0
        %v1163 = vsel %vm978, %v1146, 0
        %v1166 = vsel %vm978, %v1147, 0
        %1168 = vmatpush.msra.mxu0 0.0
        %1169 = vmatpush.msra.mxu0 0.0
        %1170 = vmatpush.msra.mxu0 0.0
        %1171 = vmatpush.msra.mxu0 0.0
        %1172 = vmatpush.msra.mxu0 0.0
        %1173 = vmatpush.msra.mxu0 0.0
        %1174 = vmatpush.msra.mxu0 0.0
        %1175 = vmatpush.msra.mxu0 0.0
        %1176 = vmatpush.msra.mxu0 0.0
        %1177 = vmatpush.msra.mxu0 0.0
        %1178 = vmatpush.msra.mxu0 0.0
        %1179 = vmatpush.msra.mxu0 0.0
        %1180 = vmatpush.msra.mxu0 0.0
        %1181 = vmatpush.msra.mxu0 0.0
        %1182 = vmatpush.msra.mxu0 0.0
        %1183 = vmatpush.msra.mxu0 %v393
        %1184 = vmatmul.f32.gmra.mxu0 %v1163
        %v1185 = vpop.f32.mrf.mxu0
        %v1186 = vadd.f32 0.0, %v1185
        %1187 = vmatmul.f32.gmra.mxu0 %v1166
        %v1188 = vpop.f32.mrf.mxu0
        %v1189 = vadd.f32 0.0, %v1188
        %1190 = vdwg.mxu0
        %1191 = vst.msk [vmem:[%s378] sm:$0xff] %vm415, %v803
        %1192 = vst.msk [vmem:[%s378 + $0x8] sm:$0xff] %vm415, %v826
        %1193 = vst.msk [vmem:[%s378 + $0x10] sm:$0xff] %vm415, %v849
        %1194 = vst.msk [vmem:[%s378 + $0x18] sm:$0xff] %vm415, %v872
        %1195 = vst.msk [vmem:[%s385] sm:$0xff] %vm415, %v1003
        %1196 = vst.msk [vmem:[%s385 + $0x8] sm:$0xff] %vm415, %v1006
        %1197 = vst.msk [vmem:[%s385 + $0x10] sm:$0xff] %vm415, %v1064
        %1198 = vst.msk [vmem:[%s385 + $0x18] sm:$0xff] %vm415, %v1067
        %1199 = vst.msk [vmem:[%s385 + $0x20] sm:$0xff] %vm415, %v1125
        %1200 = vst.msk [vmem:[%s385 + $0x28] sm:$0xff] %vm415, %v1128
        %1201 = vst.msk [vmem:[%s385 + $0x30] sm:$0xff] %vm415, %v1186
        %1202 = vst.msk [vmem:[%s385 + $0x38] sm:$0xff] %vm415, %v1189
        %s1203 = sand.u32 %s176, 1
        %s1204 = scalar_lea.sflag [#allocation4], %s1203
        %s1205 = sand.u32 %s176, 1
        %s1206 = smul.addr %s1205, 32
        %s1207 = scalar_lea.vmem [#allocation10], %s1206
        %s1208 = sand.u32 %s202, 1
        %s1209 = scalar_lea.sflag [#allocation12], %s1208
        %s1210 = sand.u32 %s202, 1
        %s1211 = smul.addr %s1210, 64
        %s1212 = scalar_lea.vmem [#allocation11], %s1211
        // Predicated region
        $region61: #{tpu_custom_call.1} parent=43 // pred_check
          %p1213 = pneg %p186
        $region62: #{tpu_custom_call.1} parent=43 // pred_check_branch
          %1215 = sbr.rel (%p1213) target = $region64
        $region63: #{tpu_custom_call.1} parent=43 // pred_region
          %s1216 = smul.u32 4, %s32
          %1218 = vsyncadd %s1204, 0
          %s1219 = smul.addr %s1216, 8
          %s1220 = scalar_lea.hbm %s6, %s1219
          %s1221 = sshll.u32 %s1207, 4
          %s1222 = int_to_ptr.vmem [resolvable:$true] %s1221
          %s1223 = sshll.u32 %s1220, 4
          %s1224 = int_to_ptr.hbm [resolvable:$true] %s1223
          %1229 = dma.vmem_to_hbm [thread:$0]  %s1222, 512, %s1224, %s1204, 128, 128, 8
        $region64: #{tpu_custom_call.1} parent=43 // pred_fallthru
          _
        // Predicated region
        $region65: #{tpu_custom_call.1} parent=43 // pred_check
          %p1230 = pneg %p212
        $region66: #{tpu_custom_call.1} parent=43 // pred_check_branch
          %1232 = sbr.rel (%p1230) target = $region68
        $region67: #{tpu_custom_call.1} parent=43 // pred_region
          %s1233 = smul.u32 4, %s32
          %1235 = vsyncadd %s1209, 0
          %s1236 = smul.addr %s1233, 2
          %s1237 = smul.addr %s1236, 8
          %s1238 = scalar_lea.hbm %s7, %s1237
          %s1239 = sshll.u32 %s1212, 4
          %s1240 = int_to_ptr.vmem [resolvable:$true] %s1239
          %s1241 = sshll.u32 %s1238, 4
          %s1242 = int_to_ptr.hbm [resolvable:$true] %s1241
          %1247 = dma.vmem_to_hbm [thread:$0]  %s1240, 1024, %s1242, %s1209, 128, 128, 8
        $region68: #{tpu_custom_call.1} parent=43 // pred_fallthru
          _
      $region44: #{tpu_custom_call.1} parent=5 // pred_fallthru
        _
      %p1248 = scmp.le.s32.totalorder 2, %s27
      // Predicated region
      $region69: #{tpu_custom_call.1} parent=5 // pred_check
        %p1249 = pneg %p1248
      $region70: #{tpu_custom_call.1} parent=5 // pred_check_branch
        %1251 = sbr.rel (%p1249) target = $region72
      $region71: #{tpu_custom_call.1} parent=5 // pred_region
        %s1252 = ssub.s32 %s27, 2
        // Predicated region
        $region73: #{tpu_custom_call.1} parent=71 // pred_check
          %p1253 = pneg %p192
        $region74: #{tpu_custom_call.1} parent=71 // pred_check_branch
          %1255 = sbr.rel (%p1253) target = $region76
        $region75: #{tpu_custom_call.1} parent=71 // pred_region
          %s1256 = sand.u32 %s177, 1
          %s1257 = scalar_lea.sflag [#allocation4], %s1256
          %s1258 = sand.u32 %s177, 1
          %s1259 = smul.addr %s1258, 32
          %s1260 = scalar_lea.vmem [#allocation10], %s1259
          %1262 = dma.done %s1257, 512
        $region76: #{tpu_custom_call.1} parent=71 // pred_fallthru
          _
        // Predicated region
        $region77: #{tpu_custom_call.1} parent=71 // pred_check
          %p1263 = pneg %p218
        $region78: #{tpu_custom_call.1} parent=71 // pred_check_branch
          %1265 = sbr.rel (%p1263) target = $region80
        $region79: #{tpu_custom_call.1} parent=71 // pred_region
          %s1266 = sand.u32 %s203, 1
          %s1267 = scalar_lea.sflag [#allocation12], %s1266
          %s1268 = sand.u32 %s203, 1
          %s1269 = smul.addr %s1268, 64
          %s1270 = scalar_lea.vmem [#allocation11], %s1269
          %1272 = dma.done %s1267, 1024
        $region80: #{tpu_custom_call.1} parent=71 // pred_fallthru
          _
      $region72: #{tpu_custom_call.1} parent=5 // pred_fallthru
        _
    $region6: #{tpu_custom_call.1} parent=1 // loop_footer
      %s31 = sadd.s32 1, %s27
    $region7: #{tpu_custom_call.1} parent=1 // loop_footer_branch
      %26 = sbr.rel target = $region3
    $region8: #{tpu_custom_call.1} parent=1 // loop_exit
      _
    %1273 = vsyncpa [#allocation3], 1
    %s1274 = scalar_lea.sflag [#allocation3], 1
    %1275 = vsyncpa %s1274, 1
    %1276 = vsyncpa [#allocation6], 1
    %s1277 = scalar_lea.sflag [#allocation6], 1
    %1278 = vsyncpa %s1277, 1
    %1279 = vsyncpa [#allocation9], 1
    %1280 = vsyncpa [#allocation4], 1
    %s1281 = scalar_lea.sflag [#allocation4], 1
    %1282 = vsyncpa %s1281, 1
    %1283 = vsyncpa [#allocation12], 1
    %s1284 = scalar_lea.sflag [#allocation12], 1
    %1285 = vsyncpa %s1284, 1

</llo_original>
